<compile_context>
chip_gen: v5e
topology: v5e:2x2
jax: 0.10.0
libtpu: 0.0.40
codegen_flags: <defaults>
</compile_context>

<pallas_src>
import jax
import jax.numpy as jnp
import numpy as np
from jax.experimental import pallas as pl
from jax.experimental.pallas import tpu as pltpu


def _fused_encoder_kernel(x_ref, w_ref, b_ref, o_ref):
    """One MXU matmul against the block-diagonal weight, bias + relu, one store.

    x_ref: (TILE_B, K_total)   concat of all vector inputs along features
    w_ref: (K_total, N_total)  block-diagonal weights  (VMEM-resident)
    b_ref: (1, N_total)        concatenated biases     (VMEM-resident)
    o_ref: (TILE_B, N_total)
    """
    y = jnp.dot(x_ref[...], w_ref[...], preferred_element_type=jnp.float32)
    y = jnp.maximum(y + b_ref[...], 0.0)
    o_ref[...] = y.astype(o_ref.dtype)


def _choose_tile_b(batch, k_total, n_total, bytes_per_elem=4,
                   vmem_budget_bytes=16 << 20):
    """Pick a batch tile: full-extent when small, otherwise 8-aligned and
    sized against a v7x-safe VMEM budget (double-buffered x + out tiles)."""
    if batch <= 1024:
        # Full-extent block is always layout-legal and tiny at these widths.
        return batch
    tile = 1024

    def step_bytes(t):
        # 2x buffers for the pipelined input and output tiles.
        return 2 * t * (k_total + n_total) * bytes_per_elem

    while tile > 8 and step_bytes(tile) > vmem_budget_bytes:
        tile //= 2
    return max(8, tile)


class MultiVectorNetwork:
    """JAX/Pallas port of rls MultiVectorNetwork."""

    def __init__(self, vector_dim=(), h_dim=16, network_type='identity',
                 key=None, out_dtype=jnp.float32):
        assert network_type in ('identity', 'encoder')
        self.vector_dim = tuple(int(d) for d in vector_dim)
        self.network_type = network_type
        self.out_dtype = out_dtype
        self.per_net_h = ([h_dim] * len(self.vector_dim)
                          if network_type == 'encoder'
                          else list(self.vector_dim))
        self.h_dim = sum(self.per_net_h)

        self.params = []          # per-net (W_i, b_i), kept for reference()
        self.w_blk = None         # fused block-diagonal weight (K_total, N_total)
        self.b_blk = None         # fused bias (1, N_total)
        if network_type == 'encoder':
            if key is None:
                key = jax.random.PRNGKey(0)
            k_total = sum(self.vector_dim)
            n_total = self.h_dim
            w_blk = np.zeros((k_total, n_total), np.float32)
            b_parts = []
            row = 0
            for i, in_dim in enumerate(self.vector_dim):
                key, kw, kb = jax.random.split(key, 3)
                bound = 1.0 / np.sqrt(in_dim)       # PyTorch Linear-style init
                w = jax.random.uniform(kw, (in_dim, h_dim), jnp.float32,
                                       -bound, bound)
                b = jax.random.uniform(kb, (1, h_dim), jnp.float32,
                                       -bound, bound)
                self.params.append((w, b))
                w_blk[row:row + in_dim, i * h_dim:(i + 1) * h_dim] = np.asarray(w)
                b_parts.append(b)
                row += in_dim
            self.w_blk = jnp.asarray(w_blk)
            self.b_blk = jnp.concatenate(b_parts, axis=-1)

    def __call__(self, *vector_inputs):
        assert len(vector_inputs) == len(self.vector_dim)

        if self.network_type == 'identity':
            # Pure memory copy: XLA's fused concat beats a Pallas launch +
            # per-branch masked stores (per perf review).
            return jnp.concatenate(
                [x.astype(self.out_dtype) for x in vector_inputs], axis=-1)

        # Encoder path: fused block-diagonal matmul Pallas kernel.
        x = jnp.concatenate(vector_inputs, axis=-1)       # (B, K_total)
        batch, k_total = x.shape
        n_total = self.h_dim

        tile_b = _choose_tile_b(batch, k_total, n_total)
        grid = (pl.cdiv(batch, tile_b),)

        # 2x pipelined x/out tiles + resident W/b, 2x headroom, capped well
        # under v7x's 64 MiB physical VMEM.
        step_bytes = (2 * tile_b * (k_total + n_total) * 4
                      + k_total * n_total * 4 + n_total * 4)
        vmem_limit = int(min(max(4 * step_bytes, 8 << 20), 48 << 20))

        return pl.pallas_call(
            _fused_encoder_kernel,
            out_shape=jax.ShapeDtypeStruct((batch, n_total), self.out_dtype),
            grid=grid,
            in_specs=[
                pl.BlockSpec((tile_b, k_total), lambda i: (i, 0)),   # x tiles
                pl.BlockSpec((k_total, n_total), lambda i: (0, 0)),  # W resident
                pl.BlockSpec((1, n_total), lambda i: (0, 0)),        # b resident
            ],
            out_specs=pl.BlockSpec((tile_b, n_total), lambda i: (i, 0)),
            compiler_params=pltpu.CompilerParams(
                dimension_semantics=("parallel",),       # 2 TCs on v7x
                vmem_limit_bytes=vmem_limit),
        )(x, self.w_blk, self.b_blk)

    # Pure-JAX reference (mirrors the per-branch torch semantics).
    def reference(self, *vector_inputs):
        outs = []
        for i, x in enumerate(vector_inputs):
            if self.network_type == 'encoder':
                w, b = self.params[i]
                outs.append(jnp.maximum(x @ w + b, 0.0))
            else:
                outs.append(x)
        return jnp.concatenate(outs, axis=-1).astype(self.out_dtype)


if __name__ == "__main__":
    key = jax.random.PRNGKey(0)
    vector_dim = [8, 12, 6]
    h_dim = 16
    k_in, k_par = jax.random.split(key)

    # --- small batch: single full-extent block -------------------------------
    batch = 4
    in_keys = jax.random.split(k_in, len(vector_dim))
    xs = [jax.random.normal(k, (batch, d), jnp.float32)
          for k, d in zip(in_keys, vector_dim)]

    # identity (module default): plain concat, no kernel launch.
    net_id = MultiVectorNetwork(vector_dim, h_dim=h_dim, network_type='identity')
    out_id = jax.block_until_ready(net_id(*xs))
    np.testing.assert_allclose(np.asarray(out_id),
                               np.asarray(net_id.reference(*xs)),
                               rtol=1e-6, atol=1e-6)
    assert out_id.shape == (batch, sum(vector_dim))

    # encoder: fused block-diagonal matmul Pallas kernel.
    net_enc = MultiVectorNetwork(vector_dim, h_dim=h_dim,
                                 network_type='encoder', key=k_par)
    out_enc = jax.block_until_ready(net_enc(*xs))
    np.testing.assert_allclose(np.asarray(out_enc),
                               np.asarray(net_enc.reference(*xs)),
                               rtol=1e-5, atol=1e-5)
    assert out_enc.shape == (batch, h_dim * len(vector_dim))

    # --- moderate batch: exercises the tiled grid + partial last block -------
    batch2 = 1536   # tile_b = 1024 -> grid = (2,), last block partial
    in_keys2 = jax.random.split(jax.random.PRNGKey(1), len(vector_dim))
    xs2 = [jax.random.normal(k, (batch2, d), jnp.float32)
           for k, d in zip(in_keys2, vector_dim)]
    out_enc2 = jax.block_until_ready(net_enc(*xs2))
    np.testing.assert_allclose(np.asarray(out_enc2),
                               np.asarray(net_enc.reference(*xs2)),
                               rtol=1e-5, atol=1e-5)
    assert out_enc2.shape == (batch2, h_dim * len(vector_dim))

    print("KERNEL_OK")
</pallas_src>

<mosaic_0001>
module attributes {stable_mosaic.version = 11 : i64} {
  func.func @_fused_encoder_kernel(%arg0: i32, %arg1: memref<4x26xf32, #tpu.memory_space<vmem>>, %arg2: memref<26x48xf32, #tpu.memory_space<vmem>>, %arg3: memref<1x48xf32, #tpu.memory_space<vmem>>, %arg4: memref<4x48xf32, #tpu.memory_space<vmem>>) attributes {dimension_semantics = [#tpu.dimension_semantics<parallel>], iteration_bounds = array<i64: 1>, scalar_prefetch = 0 : i64, scratch_operands = 0 : i64, tpu.core_type = #tpu.core_type<tc>, window_params = [{transform_indices = @transform_0, window_bounds = array<i64: 4, 26>}, {pipeline_mode = #tpu.pipeline_mode<synchronous>, transform_indices = @transform_1, window_bounds = array<i64: 26, 48>}, {pipeline_mode = #tpu.pipeline_mode<synchronous>, transform_indices = @transform_2, window_bounds = array<i64: 1, 48>}, {transform_indices = @transform_3, window_bounds = array<i64: 4, 48>}]} {
    %c0 = arith.constant 0 : index
    %c0_0 = arith.constant 0 : index
    %0 = vector.load %arg1[%c0, %c0_0] : memref<4x26xf32, #tpu.memory_space<vmem>>, vector<4x26xf32>
    %c0_1 = arith.constant 0 : index
    %c0_2 = arith.constant 0 : index
    %1 = vector.load %arg2[%c0_1, %c0_2] : memref<26x48xf32, #tpu.memory_space<vmem>>, vector<26x48xf32>
    %cst = arith.constant dense<0.000000e+00> : vector<4x48xf32>
    %2 = tpu.matmul %0, %1, %cst {dimension_numbers = #tpu.dot_dimension_numbers<[1], [0], [0], [1], [0, 0, 1, 1], [], []>} : vector<4x26xf32>, vector<26x48xf32>, vector<4x48xf32> -> vector<4x48xf32>
    %c0_3 = arith.constant 0 : index
    %c0_4 = arith.constant 0 : index
    %3 = vector.load %arg3[%c0_3, %c0_4] : memref<1x48xf32, #tpu.memory_space<vmem>>, vector<1x48xf32>
    %4 = vector.broadcast %3 : vector<1x48xf32> to vector<4x48xf32>
    %5 = arith.addf %2, %4 : vector<4x48xf32>
    %cst_5 = arith.constant 0.000000e+00 : f32
    %6 = vector.broadcast %cst_5 : f32 to vector<4x48xf32>
    %7 = arith.maximumf %5, %6 : vector<4x48xf32>
    %c0_6 = arith.constant 0 : index
    %c0_7 = arith.constant 0 : index
    %8 = vector.load %arg4[%c0_6, %c0_7] : memref<4x48xf32, #tpu.memory_space<vmem>>, vector<4x48xf32>
    tpu.vector_store %arg4[%c0_6, %c0_7], %7 {strides = array<i32>} : memref<4x48xf32, #tpu.memory_space<vmem>>, vector<4x48xf32>,
    return
  }
  func.func @transform_0(%arg0: i32) -> (i32, i32) {
    %c0_i32 = arith.constant 0 : i32
    %c0_i32_0 = arith.constant 0 : i32
    return %arg0, %c0_i32 : i32, i32
  }
  func.func @transform_1(%arg0: i32) -> (i32, i32) {
    %c0_i32 = arith.constant 0 : i32
    %c0_i32_0 = arith.constant 0 : i32
    %c0_i32_1 = arith.constant 0 : i32
    return %c0_i32, %c0_i32_0 : i32, i32
  }
  func.func @transform_2(%arg0: i32) -> (i32, i32) {
    %c0_i32 = arith.constant 0 : i32
    %c0_i32_0 = arith.constant 0 : i32
    %c0_i32_1 = arith.constant 0 : i32
    return %c0_i32, %c0_i32_0 : i32, i32
  }
  func.func @transform_3(%arg0: i32) -> (i32, i32) {
    %c0_i32 = arith.constant 0 : i32
    %c0_i32_0 = arith.constant 0 : i32
    return %arg0, %c0_i32 : i32, i32
  }
}

</mosaic_0001>

<llo_original>
// kernel: tpu_custom_call.1
$region0: #{tpu_custom_call.1}
  #allocation0 [shape = 'u32[]', space=smem, size = 0x4, offset = 0x4, fixed_abs, tag = 'smem constant byte address 0x4 - core index']
  #allocation1 [shape = 'u32[72,128]{1,0:T(1,128)}', space=vmem, size = 0x9000, scoped, tag = 'internal scratch']
  %s0 = inlined_call_operand.hbm [shape: f32[4,26], index: 0, kind: input, shape index: {}]
  %s1 = inlined_call_operand.hbm [shape: f32[26,48], index: 1, kind: input, shape index: {}]
  %s2 = inlined_call_operand.vmem [shape: f32[1,48], index: 2, kind: input, shape index: {}]
  %s3 = inlined_call_operand.hbm [shape: f32[4,48], index: 3, kind: output, shape index: {}]
  %s4 = sld [smem:[#allocation0]]
  $region30: #{tpu_custom_call.1} parent=0
    _
  %s6 = ssub.s32 1, %s4
  %s7 = scalar_select 0, %s6, %s4
  $region1: #{tpu_custom_call.1} parent=0
    #allocation2 [shape = 'u8[2048]{0}', space=vmem, size = 0x800, scoped, tag = 'input window, operand 0, single buffered']
    #allocation3 [shape = 's32[1]{0}', space=sflag, size = 0x4, scoped, tag = 'scoped memory for tpu_custom_call.1']
    #allocation4 [shape = 's32[1]{0}', space=sflag, size = 0x4, scoped, tag = 'scoped memory for tpu_custom_call.1']
    #allocation5 [shape = 'u8[16384]{0}', space=vmem, size = 0x4000, scoped, tag = 'input window, operand 1, single buffered']
    #allocation6 [shape = 's32[1]{0}', space=sflag, size = 0x4, scoped, tag = 'scoped memory for tpu_custom_call.1']
    #allocation7 [shape = 'u8[2048]{0}', space=vmem, size = 0x800, scoped, tag = 'output window, operand 0, single buffered']
    %8 = vsyncpa [#allocation3], 0
    %9 = vsyncpa [#allocation6], 0
    %10 = vsyncpa [#allocation4], 0
    // Predicated region
    $region2: #{tpu_custom_call.1} parent=1 // pred_check
      _
    $region3: #{tpu_custom_call.1} parent=1 // pred_check_branch
      %12 = sbr.rel (0) target = $region5
    $region4: #{tpu_custom_call.1} parent=1 // pred_region
      %14 = vsyncadd [#allocation3], 0
      %s16 = sshll.u32 %s0, 4
      %s17 = int_to_ptr.hbm [resolvable:$true] %s16
      %s18 = sshll.u32 [#allocation2], 4
      %s19 = int_to_ptr.vmem [resolvable:$true] %s18
      %21 = dma.hbm_to_vmem [thread:$0]  %s17, 64, %s19, [#allocation3]
    $region5: #{tpu_custom_call.1} parent=1 // pred_fallthru
      _
    // Predicated region
    $region6: #{tpu_custom_call.1} parent=1 // pred_check
      _
    $region7: #{tpu_custom_call.1} parent=1 // pred_check_branch
      %23 = sbr.rel (0) target = $region9
    $region8: #{tpu_custom_call.1} parent=1 // pred_region
      %25 = vsyncadd [#allocation6], 0
      %s26 = sshll.u32 %s1, 4
      %s27 = int_to_ptr.hbm [resolvable:$true] %s26
      %s28 = sshll.u32 [#allocation5], 4
      %s29 = int_to_ptr.vmem [resolvable:$true] %s28
      %34 = dma.hbm_to_vmem [thread:$0]  %s27, 512, %s29, [#allocation6], 128, 128, 8
    $region9: #{tpu_custom_call.1} parent=1 // pred_fallthru
      _
    // Predicated region
    $region10: #{tpu_custom_call.1} parent=1 // pred_check
      _
    $region11: #{tpu_custom_call.1} parent=1 // pred_check_branch
      %36 = sbr.rel (0) target = $region13
    $region12: #{tpu_custom_call.1} parent=1 // pred_region
      _
    $region13: #{tpu_custom_call.1} parent=1 // pred_fallthru
      _
    // Predicated region
    $region14: #{tpu_custom_call.1} parent=1 // pred_check
      _
    $region15: #{tpu_custom_call.1} parent=1 // pred_check_branch
      %38 = sbr.rel (0) target = $region17
    $region16: #{tpu_custom_call.1} parent=1 // pred_region
      %40 = dma.done [#allocation3], 64
    $region17: #{tpu_custom_call.1} parent=1 // pred_fallthru
      _
    // Predicated region
    $region18: #{tpu_custom_call.1} parent=1 // pred_check
      _
    $region19: #{tpu_custom_call.1} parent=1 // pred_check_branch
      %42 = sbr.rel (0) target = $region21
    $region20: #{tpu_custom_call.1} parent=1 // pred_region
      %44 = dma.done [#allocation6], 512
    $region21: #{tpu_custom_call.1} parent=1 // pred_fallthru
      _
    %v45 = vld [vmem:[#allocation2] sm:$0xf]
    %v46 = vld [vmem:[#allocation5] sm:$0xff]
    %v47 = vld [vmem:[#allocation5 + $0x8] sm:$0xff]
    %v48 = vld [vmem:[#allocation5 + $0x10] sm:$0xff]
    %v49 = vld [vmem:[#allocation5 + $0x18] sm:$0x3]
    %v50 = vld [vmem:[%s2] sm:$0x1]
    %v52 = vperm.slane %v50, 0
    %vm54 = vcmask 211968
    %v56 = vsel %vm54, %v45, 0
    %vm58 = vcmask 1041408
    %v60 = vsel %vm58, %v49, 0
    %62 = vmatpush.msra.mxu0 0.0
    %63 = vmatpush.msra.mxu0 0.0
    %64 = vmatpush.msra.mxu0 0.0
    %65 = vmatpush.msra.mxu0 0.0
    %66 = vmatpush.msra.mxu0 0.0
    %67 = vmatpush.msra.mxu0 0.0
    %68 = vmatpush.msra.mxu0 0.0
    %69 = vmatpush.msra.mxu0 0.0
    %70 = vmatpush.msra.mxu0 0.0
    %71 = vmatpush.msra.mxu0 0.0
    %72 = vmatpush.msra.mxu0 0.0
    %73 = vmatpush.msra.mxu0 0.0
    %74 = vmatpush.msra.mxu0 %v60
    %75 = vmatpush.msra.mxu0 %v48
    %76 = vmatpush.msra.mxu0 %v47
    %77 = vmatpush.msra.mxu0 %v46
    %78 = vmatmul.f32.gmra.mxu0 %v56
    %v79 = vpop.f32.mrf.mxu0
    %v80 = vadd.f32 %v52, %v79
    %81 = vdwg.mxu0
    %v82 = vmax.f32 %v80, 0.0
    %vm83 = vcmask 388096
    %84 = vst.msk [vmem:[#allocation7] sm:$0xf] %vm83, %v82
    // Predicated region
    $region22: #{tpu_custom_call.1} parent=1 // pred_check
      _
    $region23: #{tpu_custom_call.1} parent=1 // pred_check_branch
      %86 = sbr.rel (0) target = $region25
    $region24: #{tpu_custom_call.1} parent=1 // pred_region
      %88 = vsyncadd [#allocation4], 0
      %s90 = sshll.u32 [#allocation7], 4
      %s91 = int_to_ptr.vmem [resolvable:$true] %s90
      %s92 = sshll.u32 %s3, 4
      %s93 = int_to_ptr.hbm [resolvable:$true] %s92
      %95 = dma.vmem_to_hbm [thread:$0]  %s91, 64, %s93, [#allocation4]
    $region25: #{tpu_custom_call.1} parent=1 // pred_fallthru
      _
    // Predicated region
    $region26: #{tpu_custom_call.1} parent=1 // pred_check
      _
    $region27: #{tpu_custom_call.1} parent=1 // pred_check_branch
      %97 = sbr.rel (0) target = $region29
    $region28: #{tpu_custom_call.1} parent=1 // pred_region
      %99 = dma.done [#allocation4], 64
    $region29: #{tpu_custom_call.1} parent=1 // pred_fallthru
      _
    %100 = vsyncpa [#allocation3], 1
    %101 = vsyncpa [#allocation6], 1
    %102 = vsyncpa [#allocation4], 1

</llo_original>
